<compile_context>
chip_gen: v5e
topology: v5e:2x2
jax: 0.10.0
libtpu: 0.0.40
codegen_flags: <defaults>
</compile_context>

<pallas_src>
import jax
import jax.numpy as jnp
from jax.experimental import pallas as pl
from jax.experimental.pallas import tpu as pltpu


def _round_up(n, m):
    return ((n + m - 1) // m) * m


def _mlp_kernel(x_ref,
                w1_ref, b1_ref,
                w2_ref, b2_ref,
                w3_ref, b3_ref,
                w4_ref, b4_ref,
                o_ref):
    # All four layers on the MXU: bf16 inputs, f32 accumulation. Bias add and
    # ReLU stay in f32; the bf16 cast for the next matmul is fused into the
    # ReLU so only the bf16 copy of each hidden tensor is kept around.
    x = x_ref[...].astype(jnp.bfloat16)                                # (TB, 8)

    h1 = jnp.dot(x, w1_ref[...], preferred_element_type=jnp.float32)   # (TB, 512)
    h1 = jnp.maximum(h1 + b1_ref[...], 0.0).astype(jnp.bfloat16)

    h2 = jnp.dot(h1, w2_ref[...], preferred_element_type=jnp.float32)  # (TB, 256)
    h2 = jnp.maximum(h2 + b2_ref[...], 0.0).astype(jnp.bfloat16)

    h3 = jnp.dot(h2, w3_ref[...], preferred_element_type=jnp.float32)  # (TB, 64)
    h3 = jnp.maximum(h3 + b3_ref[...], 0.0).astype(jnp.bfloat16)

    # fc4: output width 1 -> MXU matmul against (64,128) weight with only
    # lane 0 populated (cheaper than an XLU lane-reduce); take lane 0 + bias.
    y = jnp.dot(h3, w4_ref[...], preferred_element_type=jnp.float32)   # (TB, 128)
    o_ref[...] = (y[:, 0:1] + b4_ref[...]).astype(o_ref.dtype)


def _default_tiling():
    """Pick (block_rows, vmem_limit_bytes) per TPU generation."""
    try:
        vmem = int(pltpu.get_tpu_info().vmem_capacity_bytes)
    except Exception:
        vmem = 64 << 20                      # conservative fallback (v7x-sized)
    if vmem >= (100 << 20):                  # v5e / v6e: 128 MiB physical VMEM
        return 8192, 80 << 20
    return 4096, 44 << 20                    # v7x: 64 MiB physical VMEM


def net_forward(x, params, *, block_rows=None, vmem_limit_bytes=None):
    """x: (B, 5) f32; params: dict of (in,out) f32 weights and (1,out) f32 biases."""
    B = x.shape[0]
    default_rows, default_vmem = _default_tiling()
    if block_rows is None:
        block_rows = default_rows
    if vmem_limit_bytes is None:
        vmem_limit_bytes = default_vmem

    # Weight prep (host side, once per call): everything that feeds the MXU is
    # bf16; biases stay f32 (added to the f32 accumulators).
    w1 = jnp.pad(params["w1"], ((0, 3), (0, 0))).astype(jnp.bfloat16)    # (8, 512)
    b1 = params["b1"]
    w2 = params["w2"].astype(jnp.bfloat16)                                # (512, 256)
    b2 = params["b2"]
    w3 = params["w3"].astype(jnp.bfloat16)                                # (256, 64)
    b3 = params["b3"]
    w4 = jnp.pad(params["w4"], ((0, 0), (0, 127))).astype(jnp.bfloat16)   # (64, 128), col 0
    b4 = params["b4"]                                                     # (1, 1)

    # Batch tiling: multiple of 8 sublanes, capped at block_rows.
    tb = min(block_rows, _round_up(B, 8))
    if B <= tb and tb >= 2048:
        # Single large tile: split into 2 so both v7x TensorCores get work.
        tb = _round_up((tb + 1) // 2, 8)
    b_pad = _round_up(B, tb)
    # Pad the ragged batch tail with zero rows and the feature dim 5 -> 8 with
    # zero columns (the matching w1 rows are zero, so results are unchanged).
    x = jnp.pad(x, ((0, b_pad - B), (0, 3)))
    n_tiles = b_pad // tb

    def resident(arr):
        # Whole array, DMA'd from HBM once and kept in VMEM across all tiles.
        return pl.BlockSpec(arr.shape, lambda i: (0, 0))

    out = pl.pallas_call(
        _mlp_kernel,
        out_shape=jax.ShapeDtypeStruct((b_pad, 1), jnp.float32),
        grid=(n_tiles,),
        in_specs=[pl.BlockSpec((tb, 8), lambda i: (i, 0))] +
                 [resident(a) for a in (w1, b1, w2, b2, w3, b3, w4, b4)],
        out_specs=pl.BlockSpec((tb, 1), lambda i: (i, 0)),
        compiler_params=pltpu.CompilerParams(
            dimension_semantics=("parallel",),   # shard tiles across v7x's 2 TCs
            vmem_limit_bytes=vmem_limit_bytes,
        ),
    )(x, w1, b1, w2, b2, w3, b3, w4, b4)
    return out[:B]


def init_params(key):
    """Deterministic init mimicking nn.Linear (uniform(-1/sqrt(fan_in), ...))."""
    dims = [5, 512, 256, 64, 1]
    params = {}
    for i in range(4):
        fan_in, fan_out = dims[i], dims[i + 1]
        key, kw, kb = jax.random.split(key, 3)
        bound = 1.0 / jnp.sqrt(jnp.float32(fan_in))
        # stored as (in, out) so the kernel does x @ W + b
        params[f"w{i+1}"] = jax.random.uniform(
            kw, (fan_in, fan_out), jnp.float32, minval=-bound, maxval=bound)
        params[f"b{i+1}"] = jax.random.uniform(
            kb, (1, fan_out), jnp.float32, minval=-bound, maxval=bound)
    return params


def _ref_forward_f32(x, params):
    h = x
    for i in range(1, 4):
        h = jnp.maximum(h @ params[f"w{i}"] + params[f"b{i}"], 0.0)
    return h @ params["w4"] + params["b4"]


if __name__ == "__main__":
    key = jax.random.PRNGKey(0)
    key, kx1, kx2, kx3 = jax.random.split(key, 4)
    params = init_params(key)

    # bf16 matmul inputs (f32 accumulation) -> loosened tolerance vs f32 ref.
    ATOL = RTOL = 3e-2

    # Small primary test.
    B = 8
    x = jax.random.normal(kx1, (B, 5), jnp.float32)
    out = net_forward(x, params)
    jax.block_until_ready(out)
    ref = _ref_forward_f32(x, params)
    assert out.shape == (B, 1)
    assert jnp.allclose(out, ref, atol=ATOL, rtol=RTOL), \
        f"max err {jnp.max(jnp.abs(out - ref))}"

    # Non-multiple-of-8 batch (padding path).
    B2 = 100
    x2 = jax.random.normal(kx2, (B2, 5), jnp.float32)
    out2 = net_forward(x2, params)
    jax.block_until_ready(out2)
    ref2 = _ref_forward_f32(x2, params)
    assert out2.shape == (B2, 1)
    assert jnp.allclose(out2, ref2, atol=ATOL, rtol=RTOL), \
        f"max err {jnp.max(jnp.abs(out2 - ref2))}"

    # Multi-tile grid path (small forced tile size so it stays cheap).
    B3 = 200
    x3 = jax.random.normal(kx3, (B3, 5), jnp.float32)
    out3 = net_forward(x3, params, block_rows=64)
    jax.block_until_ready(out3)
    ref3 = _ref_forward_f32(x3, params)
    assert out3.shape == (B3, 1)
    assert jnp.allclose(out3, ref3, atol=ATOL, rtol=RTOL), \
        f"max err {jnp.max(jnp.abs(out3 - ref3))}"

    print("KERNEL_OK")
</pallas_src>

<mosaic_0001>
module attributes {stable_mosaic.version = 11 : i64} {
  func.func @_mlp_kernel(%arg0: i32, %arg1: memref<8x8xf32, #tpu.memory_space<vmem>>, %arg2: memref<8x512xbf16, #tpu.memory_space<vmem>>, %arg3: memref<1x512xf32, #tpu.memory_space<vmem>>, %arg4: memref<512x256xbf16, #tpu.memory_space<vmem>>, %arg5: memref<1x256xf32, #tpu.memory_space<vmem>>, %arg6: memref<256x64xbf16, #tpu.memory_space<vmem>>, %arg7: memref<1x64xf32, #tpu.memory_space<vmem>>, %arg8: memref<64x128xbf16, #tpu.memory_space<vmem>>, %arg9: memref<1x1xf32, #tpu.memory_space<vmem>>, %arg10: memref<8x1xf32, #tpu.memory_space<vmem>>) attributes {dimension_semantics = [#tpu.dimension_semantics<parallel>], iteration_bounds = array<i64: 1>, scalar_prefetch = 0 : i64, scratch_operands = 0 : i64, tpu.core_type = #tpu.core_type<tc>, window_params = [{transform_indices = @transform_0, window_bounds = array<i64: 8, 8>}, {pipeline_mode = #tpu.pipeline_mode<synchronous>, transform_indices = @transform_1, window_bounds = array<i64: 8, 512>}, {pipeline_mode = #tpu.pipeline_mode<synchronous>, transform_indices = @transform_2, window_bounds = array<i64: 1, 512>}, {pipeline_mode = #tpu.pipeline_mode<synchronous>, transform_indices = @transform_3, window_bounds = array<i64: 512, 256>}, {pipeline_mode = #tpu.pipeline_mode<synchronous>, transform_indices = @transform_4, window_bounds = array<i64: 1, 256>}, {pipeline_mode = #tpu.pipeline_mode<synchronous>, transform_indices = @transform_5, window_bounds = array<i64: 256, 64>}, {pipeline_mode = #tpu.pipeline_mode<synchronous>, transform_indices = @transform_6, window_bounds = array<i64: 1, 64>}, {pipeline_mode = #tpu.pipeline_mode<synchronous>, transform_indices = @transform_7, window_bounds = array<i64: 64, 128>}, {pipeline_mode = #tpu.pipeline_mode<synchronous>, transform_indices = @transform_8, window_bounds = array<i64: 1, 1>}, {transform_indices = @transform_9, window_bounds = array<i64: 8, 1>}]} {
    %c0 = arith.constant 0 : index
    %c0_0 = arith.constant 0 : index
    %0 = vector.load %arg1[%c0, %c0_0] : memref<8x8xf32, #tpu.memory_space<vmem>>, vector<8x8xf32>
    %1 = arith.truncf %0 : vector<8x8xf32> to vector<8x8xbf16>
    %c0_1 = arith.constant 0 : index
    %c0_2 = arith.constant 0 : index
    %2 = vector.load %arg2[%c0_1, %c0_2] : memref<8x512xbf16, #tpu.memory_space<vmem>>, vector<8x512xbf16>
    %cst = arith.constant dense<0.000000e+00> : vector<8x512xf32>
    %3 = tpu.matmul %1, %2, %cst {dimension_numbers = #tpu.dot_dimension_numbers<[1], [0], [0], [1], [0, 0, 1, 1], [], []>} : vector<8x8xbf16>, vector<8x512xbf16>, vector<8x512xf32> -> vector<8x512xf32>
    %c0_3 = arith.constant 0 : index
    %c0_4 = arith.constant 0 : index
    %4 = vector.load %arg3[%c0_3, %c0_4] : memref<1x512xf32, #tpu.memory_space<vmem>>, vector<1x512xf32>
    %5 = vector.broadcast %4 : vector<1x512xf32> to vector<8x512xf32>
    %6 = arith.addf %3, %5 : vector<8x512xf32>
    %cst_5 = arith.constant 0.000000e+00 : f32
    %7 = vector.broadcast %cst_5 : f32 to vector<8x512xf32>
    %8 = arith.maximumf %6, %7 : vector<8x512xf32>
    %9 = arith.truncf %8 : vector<8x512xf32> to vector<8x512xbf16>
    %c0_6 = arith.constant 0 : index
    %c0_7 = arith.constant 0 : index
    %10 = vector.load %arg4[%c0_6, %c0_7] : memref<512x256xbf16, #tpu.memory_space<vmem>>, vector<512x256xbf16>
    %cst_8 = arith.constant dense<0.000000e+00> : vector<8x256xf32>
    %11 = tpu.matmul %9, %10, %cst_8 {dimension_numbers = #tpu.dot_dimension_numbers<[1], [0], [0], [1], [0, 0, 1, 1], [], []>} : vector<8x512xbf16>, vector<512x256xbf16>, vector<8x256xf32> -> vector<8x256xf32>
    %c0_9 = arith.constant 0 : index
    %c0_10 = arith.constant 0 : index
    %12 = vector.load %arg5[%c0_9, %c0_10] : memref<1x256xf32, #tpu.memory_space<vmem>>, vector<1x256xf32>
    %13 = vector.broadcast %12 : vector<1x256xf32> to vector<8x256xf32>
    %14 = arith.addf %11, %13 : vector<8x256xf32>
    %cst_11 = arith.constant 0.000000e+00 : f32
    %15 = vector.broadcast %cst_11 : f32 to vector<8x256xf32>
    %16 = arith.maximumf %14, %15 : vector<8x256xf32>
    %17 = arith.truncf %16 : vector<8x256xf32> to vector<8x256xbf16>
    %c0_12 = arith.constant 0 : index
    %c0_13 = arith.constant 0 : index
    %18 = vector.load %arg6[%c0_12, %c0_13] : memref<256x64xbf16, #tpu.memory_space<vmem>>, vector<256x64xbf16>
    %cst_14 = arith.constant dense<0.000000e+00> : vector<8x64xf32>
    %19 = tpu.matmul %17, %18, %cst_14 {dimension_numbers = #tpu.dot_dimension_numbers<[1], [0], [0], [1], [0, 0, 1, 1], [], []>} : vector<8x256xbf16>, vector<256x64xbf16>, vector<8x64xf32> -> vector<8x64xf32>
    %c0_15 = arith.constant 0 : index
    %c0_16 = arith.constant 0 : index
    %20 = vector.load %arg7[%c0_15, %c0_16] : memref<1x64xf32, #tpu.memory_space<vmem>>, vector<1x64xf32>
    %21 = vector.broadcast %20 : vector<1x64xf32> to vector<8x64xf32>
    %22 = arith.addf %19, %21 : vector<8x64xf32>
    %cst_17 = arith.constant 0.000000e+00 : f32
    %23 = vector.broadcast %cst_17 : f32 to vector<8x64xf32>
    %24 = arith.maximumf %22, %23 : vector<8x64xf32>
    %25 = arith.truncf %24 : vector<8x64xf32> to vector<8x64xbf16>
    %c0_18 = arith.constant 0 : index
    %c0_19 = arith.constant 0 : index
    %26 = vector.load %arg8[%c0_18, %c0_19] : memref<64x128xbf16, #tpu.memory_space<vmem>>, vector<64x128xbf16>
    %cst_20 = arith.constant dense<0.000000e+00> : vector<8x128xf32>
    %27 = tpu.matmul %25, %26, %cst_20 {dimension_numbers = #tpu.dot_dimension_numbers<[1], [0], [0], [1], [0, 0, 1, 1], [], []>} : vector<8x64xbf16>, vector<64x128xbf16>, vector<8x128xf32> -> vector<8x128xf32>
    %28 = vector.extract_strided_slice %27 {offsets = [0, 0], sizes = [8, 1], strides = [1, 1]} : vector<8x128xf32> to vector<8x1xf32>
    %c0_21 = arith.constant 0 : index
    %c0_22 = arith.constant 0 : index
    %29 = vector.load %arg9[%c0_21, %c0_22] : memref<1x1xf32, #tpu.memory_space<vmem>>, vector<1x1xf32>
    %30 = vector.broadcast %29 : vector<1x1xf32> to vector<8x1xf32>
    %31 = arith.addf %28, %30 : vector<8x1xf32>
    %c0_23 = arith.constant 0 : index
    %c0_24 = arith.constant 0 : index
    %32 = vector.load %arg10[%c0_23, %c0_24] : memref<8x1xf32, #tpu.memory_space<vmem>>, vector<8x1xf32>
    tpu.vector_store %arg10[%c0_23, %c0_24], %31 {strides = array<i32>} : memref<8x1xf32, #tpu.memory_space<vmem>>, vector<8x1xf32>,
    return
  }
  func.func @transform_0(%arg0: i32) -> (i32, i32) {
    %c0_i32 = arith.constant 0 : i32
    %c0_i32_0 = arith.constant 0 : i32
    return %arg0, %c0_i32 : i32, i32
  }
  func.func @transform_1(%arg0: i32) -> (i32, i32) {
    %c0_i32 = arith.constant 0 : i32
    %c0_i32_0 = arith.constant 0 : i32
    %c0_i32_1 = arith.constant 0 : i32
    return %c0_i32, %c0_i32_0 : i32, i32
  }
  func.func @transform_2(%arg0: i32) -> (i32, i32) {
    %c0_i32 = arith.constant 0 : i32
    %c0_i32_0 = arith.constant 0 : i32
    %c0_i32_1 = arith.constant 0 : i32
    return %c0_i32, %c0_i32_0 : i32, i32
  }
  func.func @transform_3(%arg0: i32) -> (i32, i32) {
    %c0_i32 = arith.constant 0 : i32
    %c0_i32_0 = arith.constant 0 : i32
    %c0_i32_1 = arith.constant 0 : i32
    return %c0_i32, %c0_i32_0 : i32, i32
  }
  func.func @transform_4(%arg0: i32) -> (i32, i32) {
    %c0_i32 = arith.constant 0 : i32
    %c0_i32_0 = arith.constant 0 : i32
    %c0_i32_1 = arith.constant 0 : i32
    return %c0_i32, %c0_i32_0 : i32, i32
  }
  func.func @transform_5(%arg0: i32) -> (i32, i32) {
    %c0_i32 = arith.constant 0 : i32
    %c0_i32_0 = arith.constant 0 : i32
    %c0_i32_1 = arith.constant 0 : i32
    return %c0_i32, %c0_i32_0 : i32, i32
  }
  func.func @transform_6(%arg0: i32) -> (i32, i32) {
    %c0_i32 = arith.constant 0 : i32
    %c0_i32_0 = arith.constant 0 : i32
    %c0_i32_1 = arith.constant 0 : i32
    return %c0_i32, %c0_i32_0 : i32, i32
  }
  func.func @transform_7(%arg0: i32) -> (i32, i32) {
    %c0_i32 = arith.constant 0 : i32
    %c0_i32_0 = arith.constant 0 : i32
    %c0_i32_1 = arith.constant 0 : i32
    return %c0_i32, %c0_i32_0 : i32, i32
  }
  func.func @transform_8(%arg0: i32) -> (i32, i32) {
    %c0_i32 = arith.constant 0 : i32
    %c0_i32_0 = arith.constant 0 : i32
    %c0_i32_1 = arith.constant 0 : i32
    return %c0_i32, %c0_i32_0 : i32, i32
  }
  func.func @transform_9(%arg0: i32) -> (i32, i32) {
    %c0_i32 = arith.constant 0 : i32
    %c0_i32_0 = arith.constant 0 : i32
    return %arg0, %c0_i32 : i32, i32
  }
}

</mosaic_0001>

<llo_original>
// kernel: tpu_custom_call.1
$region0: #{tpu_custom_call.1}
  #allocation0 [shape = 'u32[]', space=smem, size = 0x4, offset = 0x4, fixed_abs, tag = 'smem constant byte address 0x4 - core index']
  #allocation1 [shape = 'u32[72,128]{1,0:T(1,128)}', space=vmem, size = 0x9000, scoped, tag = 'internal scratch']
  #allocation2 [shape = 'f32[1,1]{1,0:T(1,128)S(1)}', space=vmem, size = 0x200, scoped, tag = 'scoped memory for tpu_custom_call.1']
  %s0 = inlined_call_operand.vmem [shape: f32[8,8], index: 0, kind: input, shape index: {}]
  %s1 = inlined_call_operand.vmem [shape: bf16[8,512], index: 1, kind: input, shape index: {}]
  %s2 = inlined_call_operand.vmem [shape: f32[1,512], index: 2, kind: input, shape index: {}]
  %s3 = inlined_call_operand.hbm [shape: bf16[512,256], index: 3, kind: input, shape index: {}]
  %s4 = inlined_call_operand.vmem [shape: f32[1,256], index: 4, kind: input, shape index: {}]
  %s5 = inlined_call_operand.vmem [shape: bf16[256,64], index: 5, kind: input, shape index: {}]
  %s6 = inlined_call_operand.vmem [shape: f32[1,64], index: 6, kind: input, shape index: {}]
  %s7 = inlined_call_operand.vmem [shape: bf16[64,128], index: 7, kind: input, shape index: {}]
  %s8 = inlined_call_operand.<no memory space> [shape: f32[1,1], index: 8, kind: input, shape index: {}]
  %s9 = inlined_call_operand.vmem [shape: f32[8,1], index: 9, kind: output, shape index: {}]
  %s10 = sld [smem:[#allocation0]]
  $region50: #{tpu_custom_call.1} parent=0
    _
  %s12 = ssub.s32 1, %s10
  %s13 = scalar_select 0, %s12, %s10
  %v14 = vstv %s8
  %15 = vst [vmem:[#allocation2] sm:$0x1] %v14
  $region1: #{tpu_custom_call.1} parent=0
    #allocation3 [shape = 'u8[262144]{0}', space=vmem, size = 0x40000, scoped, tag = 'input window, operand 3, single buffered']
    #allocation4 [shape = 's32[1]{0}', space=sflag, size = 0x4, scoped, tag = 'scoped memory for tpu_custom_call.1']
    %16 = vsyncpa [#allocation4], 0
    // Predicated region
    $region2: #{tpu_custom_call.1} parent=1 // pred_check
      _
    $region3: #{tpu_custom_call.1} parent=1 // pred_check_branch
      %18 = sbr.rel (0) target = $region5
    $region4: #{tpu_custom_call.1} parent=1 // pred_region
      _
    $region5: #{tpu_custom_call.1} parent=1 // pred_fallthru
      _
    // Predicated region
    $region6: #{tpu_custom_call.1} parent=1 // pred_check
      _
    $region7: #{tpu_custom_call.1} parent=1 // pred_check_branch
      %20 = sbr.rel (0) target = $region9
    $region8: #{tpu_custom_call.1} parent=1 // pred_region
      _
    $region9: #{tpu_custom_call.1} parent=1 // pred_fallthru
      _
    // Predicated region
    $region10: #{tpu_custom_call.1} parent=1 // pred_check
      _
    $region11: #{tpu_custom_call.1} parent=1 // pred_check_branch
      %22 = sbr.rel (0) target = $region13
    $region12: #{tpu_custom_call.1} parent=1 // pred_region
      _
    $region13: #{tpu_custom_call.1} parent=1 // pred_fallthru
      _
    // Predicated region
    $region14: #{tpu_custom_call.1} parent=1 // pred_check
      _
    $region15: #{tpu_custom_call.1} parent=1 // pred_check_branch
      %24 = sbr.rel (0) target = $region17
    $region16: #{tpu_custom_call.1} parent=1 // pred_region
      %26 = vsyncadd [#allocation4], 0
      %s27 = sshll.u32 %s3, 4
      %s28 = int_to_ptr.hbm [resolvable:$true] %s27
      %s29 = sshll.u32 [#allocation3], 4
      %s30 = int_to_ptr.vmem [resolvable:$true] %s29
      %35 = dma.hbm_to_vmem [thread:$0]  %s28, 8192, %s30, [#allocation4], 128, 128, 8
    $region17: #{tpu_custom_call.1} parent=1 // pred_fallthru
      _
    // Predicated region
    $region18: #{tpu_custom_call.1} parent=1 // pred_check
      _
    $region19: #{tpu_custom_call.1} parent=1 // pred_check_branch
      %37 = sbr.rel (0) target = $region21
    $region20: #{tpu_custom_call.1} parent=1 // pred_region
      _
    $region21: #{tpu_custom_call.1} parent=1 // pred_fallthru
      _
    // Predicated region
    $region22: #{tpu_custom_call.1} parent=1 // pred_check
      _
    $region23: #{tpu_custom_call.1} parent=1 // pred_check_branch
      %39 = sbr.rel (0) target = $region25
    $region24: #{tpu_custom_call.1} parent=1 // pred_region
      _
    $region25: #{tpu_custom_call.1} parent=1 // pred_fallthru
      _
    // Predicated region
    $region26: #{tpu_custom_call.1} parent=1 // pred_check
      _
    $region27: #{tpu_custom_call.1} parent=1 // pred_check_branch
      %41 = sbr.rel (0) target = $region29
    $region28: #{tpu_custom_call.1} parent=1 // pred_region
      _
    $region29: #{tpu_custom_call.1} parent=1 // pred_fallthru
      _
    // Predicated region
    $region30: #{tpu_custom_call.1} parent=1 // pred_check
      _
    $region31: #{tpu_custom_call.1} parent=1 // pred_check_branch
      %43 = sbr.rel (0) target = $region33
    $region32: #{tpu_custom_call.1} parent=1 // pred_region
      _
    $region33: #{tpu_custom_call.1} parent=1 // pred_fallthru
      _
    // Predicated region
    $region34: #{tpu_custom_call.1} parent=1 // pred_check
      _
    $region35: #{tpu_custom_call.1} parent=1 // pred_check_branch
      %45 = sbr.rel (0) target = $region37
    $region36: #{tpu_custom_call.1} parent=1 // pred_region
      _
    $region37: #{tpu_custom_call.1} parent=1 // pred_fallthru
      _
    // Predicated region
    $region38: #{tpu_custom_call.1} parent=1 // pred_check
      _
    $region39: #{tpu_custom_call.1} parent=1 // pred_check_branch
      %47 = sbr.rel (0) target = $region41
    $region40: #{tpu_custom_call.1} parent=1 // pred_region
      %49 = dma.done [#allocation4], 8192
    $region41: #{tpu_custom_call.1} parent=1 // pred_fallthru
      _
    %v51 = vld [vmem:[%s0] sm:$0xff]
    %v52 = vpack.c.bf16 %v51, %v51
    %v53 = vld [vmem:[%s1] sm:$0xff]
    %v54 = vld [vmem:[%s1 + $0x8] sm:$0xff]
    %v55 = vld [vmem:[%s2] sm:$0xf]
    %v57 = vperm.slane %v55, 0
    %v58 = vperm.slane %v55, 1
    %v59 = vperm.slane %v55, 2
    %v60 = vperm.slane %v55, 3
    %v67 = vunpack.c.l.b16 %v53
    %v68 = vunpack.c.h.b16 %v53
    %v69 = vunpack.c.l.b16 %v54
    %v70 = vunpack.c.h.b16 %v54
    %v71 = vpack.c.b16 %v67, %v67
    %v72 = vpack.c.b16 %v68, %v68
    %v73 = vpack.c.b16 %v69, %v69
    %v74 = vpack.c.b16 %v70, %v70
    %vm75 = vcmask 64512
    %v77 = vsel %vm75, %v52, 0
    %vm79 = vcmask 1043456
    %v81 = vsel %vm79, %v71, 0
    %v84 = vsel %vm79, %v72, 0
    %v87 = vsel %vm79, %v73, 0
    %v90 = vsel %vm79, %v74, 0
    %92 = vmatpush.bf16.msra.mxu0 0
    %93 = vmatpush.bf16.msra.mxu0 0
    %94 = vmatpush.bf16.msra.mxu0 0
    %95 = vmatpush.bf16.msra.mxu0 0
    %96 = vmatpush.bf16.msra.mxu0 0
    %97 = vmatpush.bf16.msra.mxu0 0
    %98 = vmatpush.bf16.msra.mxu0 0
    %99 = vmatpush.bf16.msra.mxu0 %v81
    %100 = vmatmul.bf16.gmra.mxu0 %v77
    %v101 = vpop.f32.mrf.mxu0
    %v102 = vadd.f32 %v57, %v101
    %v103 = vpop.f32.mrf.mxu0
    %104 = vdwg.mxu0
    %105 = vmatpush.bf16.msra.mxu0 0
    %106 = vmatpush.bf16.msra.mxu0 0
    %107 = vmatpush.bf16.msra.mxu0 0
    %108 = vmatpush.bf16.msra.mxu0 0
    %109 = vmatpush.bf16.msra.mxu0 0
    %110 = vmatpush.bf16.msra.mxu0 0
    %111 = vmatpush.bf16.msra.mxu0 0
    %112 = vmatpush.bf16.msra.mxu0 %v84
    %113 = vmatmul.bf16.gmra.mxu0 %v77
    %v114 = vpop.f32.mrf.mxu0
    %v115 = vadd.f32 %v58, %v114
    %v116 = vpop.f32.mrf.mxu0
    %117 = vdwg.mxu0
    %118 = vmatpush.bf16.msra.mxu0 0
    %119 = vmatpush.bf16.msra.mxu0 0
    %120 = vmatpush.bf16.msra.mxu0 0
    %121 = vmatpush.bf16.msra.mxu0 0
    %122 = vmatpush.bf16.msra.mxu0 0
    %123 = vmatpush.bf16.msra.mxu0 0
    %124 = vmatpush.bf16.msra.mxu0 0
    %125 = vmatpush.bf16.msra.mxu0 %v87
    %126 = vmatmul.bf16.gmra.mxu0 %v77
    %v127 = vpop.f32.mrf.mxu0
    %v128 = vadd.f32 %v59, %v127
    %v129 = vpop.f32.mrf.mxu0
    %130 = vdwg.mxu0
    %131 = vmatpush.bf16.msra.mxu0 0
    %132 = vmatpush.bf16.msra.mxu0 0
    %133 = vmatpush.bf16.msra.mxu0 0
    %134 = vmatpush.bf16.msra.mxu0 0
    %135 = vmatpush.bf16.msra.mxu0 0
    %136 = vmatpush.bf16.msra.mxu0 0
    %137 = vmatpush.bf16.msra.mxu0 0
    %138 = vmatpush.bf16.msra.mxu0 %v90
    %139 = vmatmul.bf16.gmra.mxu0 %v77
    %v140 = vpop.f32.mrf.mxu0
    %v141 = vadd.f32 %v60, %v140
    %v142 = vpop.f32.mrf.mxu0
    %143 = vdwg.mxu0
    %v144 = vmax.f32 %v102, 0.0
    %v145 = vmax.f32 %v115, 0.0
    %v146 = vmax.f32 %v128, 0.0
    %v147 = vmax.f32 %v141, 0.0
    %v148 = vpack.c.bf16 %v144, %v144
    %v149 = vpack.c.bf16 %v145, %v145
    %v150 = vpack.c.bf16 %v146, %v146
    %v151 = vpack.c.bf16 %v147, %v147
    %v152 = vld [vmem:[#allocation3] sm:$0xff]
    %v153 = vld [vmem:[#allocation3 + $0x8] sm:$0xff]
    %v154 = vld [vmem:[#allocation3 + $0x10] sm:$0xff]
    %v155 = vld [vmem:[#allocation3 + $0x18] sm:$0xff]
    %v156 = vld [vmem:[#allocation3 + $0x20] sm:$0xff]
    %v157 = vld [vmem:[#allocation3 + $0x28] sm:$0xff]
    %v158 = vld [vmem:[#allocation3 + $0x30] sm:$0xff]
    %v159 = vld [vmem:[#allocation3 + $0x38] sm:$0xff]
    %v160 = vld [vmem:[#allocation3 + $0x40] sm:$0xff]
    %v161 = vld [vmem:[#allocation3 + $0x48] sm:$0xff]
    %v162 = vld [vmem:[#allocation3 + $0x50] sm:$0xff]
    %v163 = vld [vmem:[#allocation3 + $0x58] sm:$0xff]
    %v164 = vld [vmem:[#allocation3 + $0x60] sm:$0xff]
    %v165 = vld [vmem:[#allocation3 + $0x68] sm:$0xff]
    %v166 = vld [vmem:[#allocation3 + $0x70] sm:$0xff]
    %v167 = vld [vmem:[#allocation3 + $0x78] sm:$0xff]
    %v168 = vld [vmem:[#allocation3 + $0x80] sm:$0xff]
    %v169 = vld [vmem:[#allocation3 + $0x88] sm:$0xff]
    %v170 = vld [vmem:[#allocation3 + $0x90] sm:$0xff]
    %v171 = vld [vmem:[#allocation3 + $0x98] sm:$0xff]
    %v172 = vld [vmem:[#allocation3 + $0xa0] sm:$0xff]
    %v173 = vld [vmem:[#allocation3 + $0xa8] sm:$0xff]
    %v174 = vld [vmem:[#allocation3 + $0xb0] sm:$0xff]
    %v175 = vld [vmem:[#allocation3 + $0xb8] sm:$0xff]
    %v176 = vld [vmem:[#allocation3 + $0xc0] sm:$0xff]
    %v177 = vld [vmem:[#allocation3 + $0xc8] sm:$0xff]
    %v178 = vld [vmem:[#allocation3 + $0xd0] sm:$0xff]
    %v179 = vld [vmem:[#allocation3 + $0xd8] sm:$0xff]
    %v180 = vld [vmem:[#allocation3 + $0xe0] sm:$0xff]
    %v181 = vld [vmem:[#allocation3 + $0xe8] sm:$0xff]
    %v182 = vld [vmem:[#allocation3 + $0xf0] sm:$0xff]
    %v183 = vld [vmem:[#allocation3 + $0xf8] sm:$0xff]
    %v184 = vld [vmem:[#allocation3 + $0x100] sm:$0xff]
    %v185 = vld [vmem:[#allocation3 + $0x108] sm:$0xff]
    %v186 = vld [vmem:[#allocation3 + $0x110] sm:$0xff]
    %v187 = vld [vmem:[#allocation3 + $0x118] sm:$0xff]
    %v188 = vld [vmem:[#allocation3 + $0x120] sm:$0xff]
    %v189 = vld [vmem:[#allocation3 + $0x128] sm:$0xff]
    %v190 = vld [vmem:[#allocation3 + $0x130] sm:$0xff]
    %v191 = vld [vmem:[#allocation3 + $0x138] sm:$0xff]
    %v192 = vld [vmem:[#allocation3 + $0x140] sm:$0xff]
    %v193 = vld [vmem:[#allocation3 + $0x148] sm:$0xff]
    %v194 = vld [vmem:[#allocation3 + $0x150] sm:$0xff]
    %v195 = vld [vmem:[#allocation3 + $0x158] sm:$0xff]
    %v196 = vld [vmem:[#allocation3 + $0x160] sm:$0xff]
    %v197 = vld [vmem:[#allocation3 + $0x168] sm:$0xff]
    %v198 = vld [vmem:[#allocation3 + $0x170] sm:$0xff]
    %v199 = vld [vmem:[#allocation3 + $0x178] sm:$0xff]
    %v200 = vld [vmem:[#allocation3 + $0x180] sm:$0xff]
    %v201 = vld [vmem:[#allocation3 + $0x188] sm:$0xff]
    %v202 = vld [vmem:[#allocation3 + $0x190] sm:$0xff]
    %v203 = vld [vmem:[#allocation3 + $0x198] sm:$0xff]
    %v204 = vld [vmem:[#allocation3 + $0x1a0] sm:$0xff]
    %v205 = vld [vmem:[#allocation3 + $0x1a8] sm:$0xff]
    %v206 = vld [vmem:[#allocation3 + $0x1b0] sm:$0xff]
    %v207 = vld [vmem:[#allocation3 + $0x1b8] sm:$0xff]
    %v208 = vld [vmem:[#allocation3 + $0x1c0] sm:$0xff]
    %v209 = vld [vmem:[#allocation3 + $0x1c8] sm:$0xff]
    %v210 = vld [vmem:[#allocation3 + $0x1d0] sm:$0xff]
    %v211 = vld [vmem:[#allocation3 + $0x1d8] sm:$0xff]
    %v212 = vld [vmem:[#allocation3 + $0x1e0] sm:$0xff]
    %v213 = vld [vmem:[#allocation3 + $0x1e8] sm:$0xff]
    %v214 = vld [vmem:[#allocation3 + $0x1f0] sm:$0xff]
    %v215 = vld [vmem:[#allocation3 + $0x1f8] sm:$0xff]
    %v216 = vld [vmem:[%s4] sm:$0x3]
    %v218 = vperm.slane %v216, 0
    %v219 = vperm.slane %v216, 1
    %v286 = vunpack.c.l.b16 %v152
    %v287 = vunpack.c.h.b16 %v152
    %v288 = vunpack.c.l.b16 %v153
    %v289 = vunpack.c.h.b16 %v153
    %v290 = vunpack.c.l.b16 %v154
    %v291 = vunpack.c.h.b16 %v154
    %v292 = vunpack.c.l.b16 %v155
    %v293 = vunpack.c.h.b16 %v155
    %v294 = vunpack.c.l.b16 %v156
    %v295 = vunpack.c.h.b16 %v156
    %v296 = vunpack.c.l.b16 %v157
    %v297 = vunpack.c.h.b16 %v157
    %v298 = vunpack.c.l.b16 %v158
    %v299 = vunpack.c.h.b16 %v158
    %v300 = vunpack.c.l.b16 %v159
    %v301 = vunpack.c.h.b16 %v159
    %v302 = vunpack.c.l.b16 %v160
    %v303 = vunpack.c.h.b16 %v160
    %v304 = vunpack.c.l.b16 %v161
    %v305 = vunpack.c.h.b16 %v161
    %v306 = vunpack.c.l.b16 %v162
    %v307 = vunpack.c.h.b16 %v162
    %v308 = vunpack.c.l.b16 %v163
    %v309 = vunpack.c.h.b16 %v163
    %v310 = vunpack.c.l.b16 %v164
    %v311 = vunpack.c.h.b16 %v164
    %v312 = vunpack.c.l.b16 %v165
    %v313 = vunpack.c.h.b16 %v165
    %v314 = vunpack.c.l.b16 %v166
    %v315 = vunpack.c.h.b16 %v166
    %v316 = vunpack.c.l.b16 %v167
    %v317 = vunpack.c.h.b16 %v167
    %v318 = vunpack.c.l.b16 %v168
    %v319 = vunpack.c.h.b16 %v168
    %v320 = vunpack.c.l.b16 %v169
    %v321 = vunpack.c.h.b16 %v169
    %v322 = vunpack.c.l.b16 %v170
    %v323 = vunpack.c.h.b16 %v170
    %v324 = vunpack.c.l.b16 %v171
    %v325 = vunpack.c.h.b16 %v171
    %v326 = vunpack.c.l.b16 %v172
    %v327 = vunpack.c.h.b16 %v172
    %v328 = vunpack.c.l.b16 %v173
    %v329 = vunpack.c.h.b16 %v173
    %v330 = vunpack.c.l.b16 %v174
    %v331 = vunpack.c.h.b16 %v174
    %v332 = vunpack.c.l.b16 %v175
    %v333 = vunpack.c.h.b16 %v175
    %v334 = vunpack.c.l.b16 %v176
    %v335 = vunpack.c.h.b16 %v176
    %v336 = vunpack.c.l.b16 %v177
    %v337 = vunpack.c.h.b16 %v177
    %v338 = vunpack.c.l.b16 %v178
    %v339 = vunpack.c.h.b16 %v178
    %v340 = vunpack.c.l.b16 %v179
    %v341 = vunpack.c.h.b16 %v179
    %v342 = vunpack.c.l.b16 %v180
    %v343 = vunpack.c.h.b16 %v180
    %v344 = vunpack.c.l.b16 %v181
    %v345 = vunpack.c.h.b16 %v181
    %v346 = vunpack.c.l.b16 %v182
    %v347 = vunpack.c.h.b16 %v182
    %v348 = vunpack.c.l.b16 %v183
    %v349 = vunpack.c.h.b16 %v183
    %v350 = vunpack.c.l.b16 %v184
    %v351 = vunpack.c.h.b16 %v184
    %v352 = vunpack.c.l.b16 %v185
    %v353 = vunpack.c.h.b16 %v185
    %v354 = vunpack.c.l.b16 %v186
    %v355 = vunpack.c.h.b16 %v186
    %v356 = vunpack.c.l.b16 %v187
    %v357 = vunpack.c.h.b16 %v187
    %v358 = vunpack.c.l.b16 %v188
    %v359 = vunpack.c.h.b16 %v188
    %v360 = vunpack.c.l.b16 %v189
    %v361 = vunpack.c.h.b16 %v189
    %v362 = vunpack.c.l.b16 %v190
    %v363 = vunpack.c.h.b16 %v190
    %v364 = vunpack.c.l.b16 %v191
    %v365 = vunpack.c.h.b16 %v191
    %v366 = vunpack.c.l.b16 %v192
    %v367 = vunpack.c.h.b16 %v192
    %v368 = vunpack.c.l.b16 %v193
    %v369 = vunpack.c.h.b16 %v193
    %v370 = vunpack.c.l.b16 %v194
    %v371 = vunpack.c.h.b16 %v194
    %v372 = vunpack.c.l.b16 %v195
    %v373 = vunpack.c.h.b16 %v195
    %v374 = vunpack.c.l.b16 %v196
    %v375 = vunpack.c.h.b16 %v196
    %v376 = vunpack.c.l.b16 %v197
    %v377 = vunpack.c.h.b16 %v197
    %v378 = vunpack.c.l.b16 %v198
    %v379 = vunpack.c.h.b16 %v198
    %v380 = vunpack.c.l.b16 %v199
    %v381 = vunpack.c.h.b16 %v199
    %v382 = vunpack.c.l.b16 %v200
    %v383 = vunpack.c.h.b16 %v200
    %v384 = vunpack.c.l.b16 %v201
    %v385 = vunpack.c.h.b16 %v201
    %v386 = vunpack.c.l.b16 %v202
    %v387 = vunpack.c.h.b16 %v202
    %v388 = vunpack.c.l.b16 %v203
    %v389 = vunpack.c.h.b16 %v203
    %v390 = vunpack.c.l.b16 %v204
    %v391 = vunpack.c.h.b16 %v204
    %v392 = vunpack.c.l.b16 %v205
    %v393 = vunpack.c.h.b16 %v205
    %v394 = vunpack.c.l.b16 %v206
    %v395 = vunpack.c.h.b16 %v206
    %v396 = vunpack.c.l.b16 %v207
    %v397 = vunpack.c.h.b16 %v207
    %v398 = vunpack.c.l.b16 %v208
    %v399 = vunpack.c.h.b16 %v208
    %v400 = vunpack.c.l.b16 %v209
    %v401 = vunpack.c.h.b16 %v209
    %v402 = vunpack.c.l.b16 %v210
    %v403 = vunpack.c.h.b16 %v210
    %v404 = vunpack.c.l.b16 %v211
    %v405 = vunpack.c.h.b16 %v211
    %v406 = vunpack.c.l.b16 %v212
    %v407 = vunpack.c.h.b16 %v212
    %v408 = vunpack.c.l.b16 %v213
    %v409 = vunpack.c.h.b16 %v213
    %v410 = vunpack.c.l.b16 %v214
    %v411 = vunpack.c.h.b16 %v214
    %v412 = vunpack.c.l.b16 %v215
    %v413 = vunpack.c.h.b16 %v215
    %v414 = vpack.c.b16 %v288, %v286
    %v415 = vpack.c.b16 %v289, %v287
    %v416 = vpack.c.b16 %v292, %v290
    %v417 = vpack.c.b16 %v293, %v291
    %v418 = vpack.c.b16 %v296, %v294
    %v419 = vpack.c.b16 %v297, %v295
    %v420 = vpack.c.b16 %v300, %v298
    %v421 = vpack.c.b16 %v301, %v299
    %v422 = vpack.c.b16 %v304, %v302
    %v423 = vpack.c.b16 %v305, %v303
    %v424 = vpack.c.b16 %v308, %v306
    %v425 = vpack.c.b16 %v309, %v307
    %v426 = vpack.c.b16 %v312, %v310
    %v427 = vpack.c.b16 %v313, %v311
    %v428 = vpack.c.b16 %v316, %v314
    %v429 = vpack.c.b16 %v317, %v315
    %v430 = vpack.c.b16 %v320, %v318
    %v431 = vpack.c.b16 %v321, %v319
    %v432 = vpack.c.b16 %v324, %v322
    %v433 = vpack.c.b16 %v325, %v323
    %v434 = vpack.c.b16 %v328, %v326
    %v435 = vpack.c.b16 %v329, %v327
    %v436 = vpack.c.b16 %v332, %v330
    %v437 = vpack.c.b16 %v333, %v331
    %v438 = vpack.c.b16 %v336, %v334
    %v439 = vpack.c.b16 %v337, %v335
    %v440 = vpack.c.b16 %v340, %v338
    %v441 = vpack.c.b16 %v341, %v339
    %v442 = vpack.c.b16 %v344, %v342
    %v443 = vpack.c.b16 %v345, %v343
    %v444 = vpack.c.b16 %v348, %v346
    %v445 = vpack.c.b16 %v349, %v347
    %v446 = vpack.c.b16 %v352, %v350
    %v447 = vpack.c.b16 %v353, %v351
    %v448 = vpack.c.b16 %v356, %v354
    %v449 = vpack.c.b16 %v357, %v355
    %v450 = vpack.c.b16 %v360, %v358
    %v451 = vpack.c.b16 %v361, %v359
    %v452 = vpack.c.b16 %v364, %v362
    %v453 = vpack.c.b16 %v365, %v363
    %v454 = vpack.c.b16 %v368, %v366
    %v455 = vpack.c.b16 %v369, %v367
    %v456 = vpack.c.b16 %v372, %v370
    %v457 = vpack.c.b16 %v373, %v371
    %v458 = vpack.c.b16 %v376, %v374
    %v459 = vpack.c.b16 %v377, %v375
    %v460 = vpack.c.b16 %v380, %v378
    %v461 = vpack.c.b16 %v381, %v379
    %v462 = vpack.c.b16 %v384, %v382
    %v463 = vpack.c.b16 %v385, %v383
    %v464 = vpack.c.b16 %v388, %v386
    %v465 = vpack.c.b16 %v389, %v387
    %v466 = vpack.c.b16 %v392, %v390
    %v467 = vpack.c.b16 %v393, %v391
    %v468 = vpack.c.b16 %v396, %v394
    %v469 = vpack.c.b16 %v397, %v395
    %v470 = vpack.c.b16 %v400, %v398
    %v471 = vpack.c.b16 %v401, %v399
    %v472 = vpack.c.b16 %v404, %v402
    %v473 = vpack.c.b16 %v405, %v403
    %v474 = vpack.c.b16 %v408, %v406
    %v475 = vpack.c.b16 %v409, %v407
    %v476 = vpack.c.b16 %v412, %v410
    %v477 = vpack.c.b16 %v413, %v411
    %542 = vmatpush.bf16.msra.mxu0 %v428
    %543 = vmatpush.bf16.msra.mxu0 %v426
    %544 = vmatpush.bf16.msra.mxu0 %v424
    %545 = vmatpush.bf16.msra.mxu0 %v422
    %546 = vmatpush.bf16.msra.mxu0 %v420
    %547 = vmatpush.bf16.msra.mxu0 %v418
    %548 = vmatpush.bf16.msra.mxu0 %v416
    %549 = vmatpush.bf16.msra.mxu0 %v414
    %550 = vmatmul.bf16.gmra.mxu0 %v148
    %v551 = vpop.f32.mrf.mxu0
    %v552 = vadd.f32 %v218, %v551
    %v553 = vpop.f32.mrf.mxu0
    %554 = vdwg.mxu0
    %555 = vmatpush.bf16.msra.mxu0 %v444
    %556 = vmatpush.bf16.msra.mxu0 %v442
    %557 = vmatpush.bf16.msra.mxu0 %v440
    %558 = vmatpush.bf16.msra.mxu0 %v438
    %559 = vmatpush.bf16.msra.mxu0 %v436
    %560 = vmatpush.bf16.msra.mxu0 %v434
    %561 = vmatpush.bf16.msra.mxu0 %v432
    %562 = vmatpush.bf16.msra.mxu0 %v430
    %563 = vmatmul.bf16.gmra.mxu0 %v149
    %v564 = vpop.f32.mrf.mxu0
    %v565 = vadd.f32 %v552, %v564
    %v566 = vpop.f32.mrf.mxu0
    %567 = vdwg.mxu0
    %568 = vmatpush.bf16.msra.mxu0 %v460
    %569 = vmatpush.bf16.msra.mxu0 %v458
    %570 = vmatpush.bf16.msra.mxu0 %v456
    %571 = vmatpush.bf16.msra.mxu0 %v454
    %572 = vmatpush.bf16.msra.mxu0 %v452
    %573 = vmatpush.bf16.msra.mxu0 %v450
    %574 = vmatpush.bf16.msra.mxu0 %v448
    %575 = vmatpush.bf16.msra.mxu0 %v446
    %576 = vmatmul.bf16.gmra.mxu0 %v150
    %v577 = vpop.f32.mrf.mxu0
    %v578 = vadd.f32 %v565, %v577
    %v579 = vpop.f32.mrf.mxu0
    %580 = vdwg.mxu0
    %581 = vmatpush.bf16.msra.mxu0 %v476
    %582 = vmatpush.bf16.msra.mxu0 %v474
    %583 = vmatpush.bf16.msra.mxu0 %v472
    %584 = vmatpush.bf16.msra.mxu0 %v470
    %585 = vmatpush.bf16.msra.mxu0 %v468
    %586 = vmatpush.bf16.msra.mxu0 %v466
    %587 = vmatpush.bf16.msra.mxu0 %v464
    %588 = vmatpush.bf16.msra.mxu0 %v462
    %589 = vmatmul.bf16.gmra.mxu0 %v151
    %v590 = vpop.f32.mrf.mxu0
    %v591 = vadd.f32 %v578, %v590
    %v592 = vpop.f32.mrf.mxu0
    %593 = vdwg.mxu0
    %594 = vmatpush.bf16.msra.mxu0 %v429
    %595 = vmatpush.bf16.msra.mxu0 %v427
    %596 = vmatpush.bf16.msra.mxu0 %v425
    %597 = vmatpush.bf16.msra.mxu0 %v423
    %598 = vmatpush.bf16.msra.mxu0 %v421
    %599 = vmatpush.bf16.msra.mxu0 %v419
    %600 = vmatpush.bf16.msra.mxu0 %v417
    %601 = vmatpush.bf16.msra.mxu0 %v415
    %602 = vmatmul.bf16.gmra.mxu0 %v148
    %v603 = vpop.f32.mrf.mxu0
    %v604 = vadd.f32 %v219, %v603
    %v605 = vpop.f32.mrf.mxu0
    %606 = vdwg.mxu0
    %607 = vmatpush.bf16.msra.mxu0 %v445
    %608 = vmatpush.bf16.msra.mxu0 %v443
    %609 = vmatpush.bf16.msra.mxu0 %v441
    %610 = vmatpush.bf16.msra.mxu0 %v439
    %611 = vmatpush.bf16.msra.mxu0 %v437
    %612 = vmatpush.bf16.msra.mxu0 %v435
    %613 = vmatpush.bf16.msra.mxu0 %v433
    %614 = vmatpush.bf16.msra.mxu0 %v431
    %615 = vmatmul.bf16.gmra.mxu0 %v149
    %v616 = vpop.f32.mrf.mxu0
    %v617 = vadd.f32 %v604, %v616
    %v618 = vpop.f32.mrf.mxu0
    %619 = vdwg.mxu0
    %620 = vmatpush.bf16.msra.mxu0 %v461
    %621 = vmatpush.bf16.msra.mxu0 %v459
    %622 = vmatpush.bf16.msra.mxu0 %v457
    %623 = vmatpush.bf16.msra.mxu0 %v455
    %624 = vmatpush.bf16.msra.mxu0 %v453
    %625 = vmatpush.bf16.msra.mxu0 %v451
    %626 = vmatpush.bf16.msra.mxu0 %v449
    %627 = vmatpush.bf16.msra.mxu0 %v447
    %628 = vmatmul.bf16.gmra.mxu0 %v150
    %v629 = vpop.f32.mrf.mxu0
    %v630 = vadd.f32 %v617, %v629
    %v631 = vpop.f32.mrf.mxu0
    %632 = vdwg.mxu0
    %633 = vmatpush.bf16.msra.mxu0 %v477
    %634 = vmatpush.bf16.msra.mxu0 %v475
    %635 = vmatpush.bf16.msra.mxu0 %v473
    %636 = vmatpush.bf16.msra.mxu0 %v471
    %637 = vmatpush.bf16.msra.mxu0 %v469
    %638 = vmatpush.bf16.msra.mxu0 %v467
    %639 = vmatpush.bf16.msra.mxu0 %v465
    %640 = vmatpush.bf16.msra.mxu0 %v463
    %641 = vmatmul.bf16.gmra.mxu0 %v151
    %v642 = vpop.f32.mrf.mxu0
    %v643 = vadd.f32 %v630, %v642
    %v644 = vpop.f32.mrf.mxu0
    %645 = vdwg.mxu0
    %v646 = vmax.f32 %v591, 0.0
    %v647 = vmax.f32 %v643, 0.0
    %v648 = vpack.c.bf16 %v646, %v646
    %v649 = vpack.c.bf16 %v647, %v647
    %v650 = vld [vmem:[%s5] sm:$0xf]
    %v651 = vld [vmem:[%s5 + $0x4] sm:$0xf]
    %v652 = vld [vmem:[%s5 + $0x8] sm:$0xf]
    %v653 = vld [vmem:[%s5 + $0xc] sm:$0xf]
    %v654 = vld [vmem:[%s5 + $0x10] sm:$0xf]
    %v655 = vld [vmem:[%s5 + $0x14] sm:$0xf]
    %v656 = vld [vmem:[%s5 + $0x18] sm:$0xf]
    %v657 = vld [vmem:[%s5 + $0x1c] sm:$0xf]
    %v658 = vld [vmem:[%s5 + $0x20] sm:$0xf]
    %v659 = vld [vmem:[%s5 + $0x24] sm:$0xf]
    %v660 = vld [vmem:[%s5 + $0x28] sm:$0xf]
    %v661 = vld [vmem:[%s5 + $0x2c] sm:$0xf]
    %v662 = vld [vmem:[%s5 + $0x30] sm:$0xf]
    %v663 = vld [vmem:[%s5 + $0x34] sm:$0xf]
    %v664 = vld [vmem:[%s5 + $0x38] sm:$0xf]
    %v665 = vld [vmem:[%s5 + $0x3c] sm:$0xf]
    %v666 = vld [vmem:[%s5 + $0x40] sm:$0xf]
    %v667 = vld [vmem:[%s5 + $0x44] sm:$0xf]
    %v668 = vld [vmem:[%s5 + $0x48] sm:$0xf]
    %v669 = vld [vmem:[%s5 + $0x4c] sm:$0xf]
    %v670 = vld [vmem:[%s5 + $0x50] sm:$0xf]
    %v671 = vld [vmem:[%s5 + $0x54] sm:$0xf]
    %v672 = vld [vmem:[%s5 + $0x58] sm:$0xf]
    %v673 = vld [vmem:[%s5 + $0x5c] sm:$0xf]
    %v674 = vld [vmem:[%s5 + $0x60] sm:$0xf]
    %v675 = vld [vmem:[%s5 + $0x64] sm:$0xf]
    %v676 = vld [vmem:[%s5 + $0x68] sm:$0xf]
    %v677 = vld [vmem:[%s5 + $0x6c] sm:$0xf]
    %v678 = vld [vmem:[%s5 + $0x70] sm:$0xf]
    %v679 = vld [vmem:[%s5 + $0x74] sm:$0xf]
    %v680 = vld [vmem:[%s5 + $0x78] sm:$0xf]
    %v681 = vld [vmem:[%s5 + $0x7c] sm:$0xf]
    %v682 = vld [vmem:[%s6] sm:$0x1]
    %v684 = vperm.slane %v682, 0
    %v718 = vunpack.c.l.b16 %v650
    %v719 = vunpack.c.l.b16 %v651
    %v720 = vunpack.c.l.b16 %v652
    %v721 = vunpack.c.l.b16 %v653
    %v722 = vunpack.c.l.b16 %v654
    %v723 = vunpack.c.l.b16 %v655
    %v724 = vunpack.c.l.b16 %v656
    %v725 = vunpack.c.l.b16 %v657
    %v726 = vunpack.c.l.b16 %v658
    %v727 = vunpack.c.l.b16 %v659
    %v728 = vunpack.c.l.b16 %v660
    %v729 = vunpack.c.l.b16 %v661
    %v730 = vunpack.c.l.b16 %v662
    %v731 = vunpack.c.l.b16 %v663
    %v732 = vunpack.c.l.b16 %v664
    %v733 = vunpack.c.l.b16 %v665
    %v734 = vunpack.c.l.b16 %v666
    %v735 = vunpack.c.l.b16 %v667
    %v736 = vunpack.c.l.b16 %v668
    %v737 = vunpack.c.l.b16 %v669
    %v738 = vunpack.c.l.b16 %v670
    %v739 = vunpack.c.l.b16 %v671
    %v740 = vunpack.c.l.b16 %v672
    %v741 = vunpack.c.l.b16 %v673
    %v742 = vunpack.c.l.b16 %v674
    %v743 = vunpack.c.l.b16 %v675
    %v744 = vunpack.c.l.b16 %v676
    %v745 = vunpack.c.l.b16 %v677
    %v746 = vunpack.c.l.b16 %v678
    %v747 = vunpack.c.l.b16 %v679
    %v748 = vunpack.c.l.b16 %v680
    %v749 = vunpack.c.l.b16 %v681
    %v750 = vpack.c.b16 %v719, %v718
    %v751 = vpack.c.b16 %v721, %v720
    %v752 = vpack.c.b16 %v723, %v722
    %v753 = vpack.c.b16 %v725, %v724
    %v754 = vpack.c.b16 %v727, %v726
    %v755 = vpack.c.b16 %v729, %v728
    %v756 = vpack.c.b16 %v731, %v730
    %v757 = vpack.c.b16 %v733, %v732
    %v758 = vpack.c.b16 %v735, %v734
    %v759 = vpack.c.b16 %v737, %v736
    %v760 = vpack.c.b16 %v739, %v738
    %v761 = vpack.c.b16 %v741, %v740
    %v762 = vpack.c.b16 %v743, %v742
    %v763 = vpack.c.b16 %v745, %v744
    %v764 = vpack.c.b16 %v747, %v746
    %v765 = vpack.c.b16 %v749, %v748
    %782 = vmatpush.bf16.msra.mxu0 %v757
    %783 = vmatpush.bf16.msra.mxu0 %v756
    %784 = vmatpush.bf16.msra.mxu0 %v755
    %785 = vmatpush.bf16.msra.mxu0 %v754
    %786 = vmatpush.bf16.msra.mxu0 %v753
    %787 = vmatpush.bf16.msra.mxu0 %v752
    %788 = vmatpush.bf16.msra.mxu0 %v751
    %789 = vmatpush.bf16.msra.mxu0 %v750
    %790 = vmatmul.bf16.gmra.mxu0 %v648
    %v791 = vpop.f32.mrf.mxu0
    %v792 = vadd.f32 %v684, %v791
    %v793 = vpop.f32.mrf.mxu0
    %794 = vdwg.mxu0
    %795 = vmatpush.bf16.msra.mxu0 %v765
    %796 = vmatpush.bf16.msra.mxu0 %v764
    %797 = vmatpush.bf16.msra.mxu0 %v763
    %798 = vmatpush.bf16.msra.mxu0 %v762
    %799 = vmatpush.bf16.msra.mxu0 %v761
    %800 = vmatpush.bf16.msra.mxu0 %v760
    %801 = vmatpush.bf16.msra.mxu0 %v759
    %802 = vmatpush.bf16.msra.mxu0 %v758
    %803 = vmatmul.bf16.gmra.mxu0 %v649
    %v804 = vpop.f32.mrf.mxu0
    %v805 = vadd.f32 %v792, %v804
    %v806 = vpop.f32.mrf.mxu0
    %807 = vdwg.mxu0
    %v808 = vmax.f32 %v805, 0.0
    %v809 = vpack.c.bf16 %v808, %v808
    %v810 = vld [vmem:[%s7] sm:$0xf]
    %v811 = vld [vmem:[%s7 + $0x4] sm:$0xf]
    %v812 = vld [vmem:[%s7 + $0x8] sm:$0xf]
    %v813 = vld [vmem:[%s7 + $0xc] sm:$0xf]
    %v814 = vld [vmem:[%s7 + $0x10] sm:$0xf]
    %v815 = vld [vmem:[%s7 + $0x14] sm:$0xf]
    %v816 = vld [vmem:[%s7 + $0x18] sm:$0xf]
    %v817 = vld [vmem:[%s7 + $0x1c] sm:$0xf]
    %v826 = vunpack.c.l.b16 %v810
    %v827 = vunpack.c.l.b16 %v811
    %v828 = vunpack.c.l.b16 %v812
    %v829 = vunpack.c.l.b16 %v813
    %v830 = vunpack.c.l.b16 %v814
    %v831 = vunpack.c.l.b16 %v815
    %v832 = vunpack.c.l.b16 %v816
    %v833 = vunpack.c.l.b16 %v817
    %v834 = vpack.c.b16 %v827, %v826
    %v835 = vpack.c.b16 %v829, %v828
    %v836 = vpack.c.b16 %v831, %v830
    %v837 = vpack.c.b16 %v833, %v832
    %vm842 = vcmask 523264
    %v844 = vsel %vm842, %v809, 0
    %846 = vmatpush.bf16.msra.mxu0 0
    %847 = vmatpush.bf16.msra.mxu0 0
    %848 = vmatpush.bf16.msra.mxu0 0
    %849 = vmatpush.bf16.msra.mxu0 0
    %850 = vmatpush.bf16.msra.mxu0 %v837
    %851 = vmatpush.bf16.msra.mxu0 %v836
    %852 = vmatpush.bf16.msra.mxu0 %v835
    %853 = vmatpush.bf16.msra.mxu0 %v834
    %854 = vmatmul.bf16.gmra.mxu0 %v844
    %v855 = vpop.f32.mrf.mxu0
    %v856 = vadd.f32 0.0, %v855
    %v857 = vpop.f32.mrf.mxu0
    %858 = vdwg.mxu0
    %v859 = vld [vmem:[#allocation2] sm:$0x1]
    %v861 = vperm.slane %v859, 0
    %v863 = vadd.f32 %v856, %v861
    %vm864 = vcmask 7168
    %865 = vst.msk [vmem:[%s9] sm:$0xff] %vm864, %v863
    // Predicated region
    $region42: #{tpu_custom_call.1} parent=1 // pred_check
      _
    $region43: #{tpu_custom_call.1} parent=1 // pred_check_branch
      %867 = sbr.rel (0) target = $region45
    $region44: #{tpu_custom_call.1} parent=1 // pred_region
      _
    $region45: #{tpu_custom_call.1} parent=1 // pred_fallthru
      _
    // Predicated region
    $region46: #{tpu_custom_call.1} parent=1 // pred_check
      _
    $region47: #{tpu_custom_call.1} parent=1 // pred_check_branch
      %869 = sbr.rel (0) target = $region49
    $region48: #{tpu_custom_call.1} parent=1 // pred_region
      _
    $region49: #{tpu_custom_call.1} parent=1 // pred_fallthru
      _
    %870 = vsyncpa [#allocation4], 1

</llo_original>
